<compile_context>
chip_gen: v7x
topology: tpu7x:2x2x1
jax: 0.10.0
libtpu: 0.0.40
codegen_flags: <defaults>
</compile_context>

<pallas_src>
import jax
import jax.numpy as jnp
import numpy as np
from jax.experimental import pallas as pl
from jax.experimental.pallas import tpu as pltpu


KS = 5            # kernel_size (unrolled for 5)
PAD = KS // 2


def _gaussian_kernel_np(kernel_size: int, sigma: float) -> np.ndarray:
    """2D Gaussian kernel, identical construction to the PyTorch module."""
    k = kernel_size // 2
    ax = np.arange(-k, k + 1, dtype=np.float32)
    xx, yy = np.meshgrid(ax, ax, indexing="ij")
    g = np.exp(-(xx ** 2 + yy ** 2) / (2.0 * sigma ** 2)).astype(np.float32)
    return g / g.sum()


def _divisors(n: int):
    return [d for d in range(1, n + 1) if n % d == 0]


def _choose_nblk(bc: int, h: int, w: int) -> int:
    """Planes packed per block along the lane axis (for lane density)."""
    wp = w + 2 * PAD
    if w >= 128:
        return 1                      # already lane-dense per plane
    hp = h + 2 * PAD
    cap = max(1, (4 * 1024 * 1024) // (hp * wp * 4))   # keep scratch <= ~4 MiB
    best = 1
    for d in _divisors(bc):
        if d > cap:
            break
        best = d
        if d * wp >= 128:             # smallest divisor reaching >=128 lanes
            return d
    return best


def _choose_strip(h: int, lane_width: int, n_plane_blocks: int) -> int:
    """Rows of output computed per grid step (register-resident accumulator)."""
    budget = 32 * 1024                # f32 bytes the acc strip may occupy
    cands = [d for d in _divisors(h)
             if d % 8 == 0 and d * lane_width * 4 <= budget]
    if not cands:
        return h                      # fallback: full height (block == full dim)
    # Prefer >= 8 total grid steps (v7x: 2 TCs x >= 4 steps), then largest strip.
    return max(cands, key=lambda s: (min(n_plane_blocks * (h // s), 8), s))


def _make_dog_kernel(taps, nblk: int, h: int, w: int, s_rows: int,
                     wp: int, wc: int):
    """Kernel body with the fused (g1 - g2) taps baked in as constants.

    Scratch layout: (Hp, nblk*Wp) f32, plane p occupies lane columns
    [p*Wp, (p+1)*Wp) with a PAD-wide zero halo on each side, so shifted reads
    for |dj| <= PAD never cross into a neighbouring plane.
    """

    def kernel(x_ref, o_ref, xp_ref):
        j = pl.program_id(1)          # row-strip index within the plane block

        @pl.when(j == 0)
        def _stage():
            # One dense zero pass per plane-block (covers all halos), then the
            # interiors are overwritten with the (single) f32 cast of the input.
            xp_ref[...] = jnp.zeros(xp_ref.shape, jnp.float32)
            for p in range(nblk):
                c0 = p * wp + PAD
                xp_ref[PAD:PAD + h, c0:c0 + w] = x_ref[p].astype(jnp.float32)

        r0 = pl.multiple_of(j * s_rows, s_rows)

        # Register-resident 25-tap accumulation over one row strip.
        # Each tap is a shifted ref slice of the padded scratch (3 vld slots);
        # acc column q holds the conv result for packed column q + PAD, i.e.
        # plane p, output column jcol lives at q = p*Wp + jcol.
        acc = None
        for di in range(KS):
            for dj in range(KS):
                wgt = taps[di][dj]
                term = wgt * xp_ref[pl.ds(r0 + di, s_rows), pl.ds(dj, wc)]
                acc = term if acc is None else acc + term

        # One store per plane per strip (interior extraction).
        for p in range(nblk):
            o_ref[p, :, :] = acc[:, p * wp:p * wp + w].astype(o_ref.dtype)

    return kernel


def dog_layer(x: jnp.ndarray,
              kernel_size: int = KS,
              sigma1: float = 1.0,
              sigma2: float = 2.0) -> jnp.ndarray:
    """Difference-of-Gaussians, x: (B, C, H, W) -> (B, C, H, W)."""
    assert kernel_size == KS, "kernel unrolled for kernel_size=5"
    B, C, H, W = x.shape
    BC = B * C

    # Fused DoG weights: blur1(x) - blur2(x) == conv(x, g1 - g2).
    g_diff = (_gaussian_kernel_np(kernel_size, sigma1)
              - _gaussian_kernel_np(kernel_size, sigma2))
    taps = [[float(g_diff[di, dj]) for dj in range(KS)] for di in range(KS)]

    nblk = _choose_nblk(BC, H, W)
    n_pb = BC // nblk                 # plane-blocks
    Wp = W + 2 * PAD
    Hp = H + 2 * PAD
    L = nblk * Wp                     # packed lane width of the scratch
    Wc = L - 2 * PAD                  # accumulator lane width

    S = _choose_strip(H, L, n_pb)     # rows per grid step (divides H)
    n_strips = H // S
    grid = (n_pb, n_strips)

    x3 = x.reshape(BC, H, W)          # leading-dim reshape is free in HBM

    itemsize = jnp.dtype(x.dtype).itemsize
    in_block = nblk * H * W * itemsize
    out_block = nblk * S * W * itemsize
    scratch_bytes = Hp * L * 4
    vmem_est = 2 * in_block + 2 * out_block + scratch_bytes
    # Conservative cap (~34 MiB) so the tiling is safe on v7x's 64 MiB VMEM
    # as well as v5e/v6e's 128 MiB.
    vmem_limit = int(min(max(2 * vmem_est, 16 * 1024 * 1024),
                         34 * 1024 * 1024))

    cost = pl.CostEstimate(
        flops=2 * KS * KS * BC * H * W,
        transcendentals=0,
        bytes_accessed=2 * BC * H * W * itemsize,
    )

    out3 = pl.pallas_call(
        _make_dog_kernel(taps, nblk, H, W, S, Wp, Wc),
        out_shape=jax.ShapeDtypeStruct((BC, H, W), x.dtype),
        grid=grid,
        # Input block is the whole plane-block; it is constant across the strip
        # axis, so Pallas keeps it resident (no re-DMA per strip).
        in_specs=[pl.BlockSpec((nblk, H, W), lambda i, j: (i, 0, 0))],
        out_specs=pl.BlockSpec((nblk, S, W), lambda i, j: (i, j, 0)),
        scratch_shapes=[pltpu.VMEM((Hp, L), jnp.float32)],
        compiler_params=pltpu.CompilerParams(
            dimension_semantics=("parallel", "arbitrary"),
            vmem_limit_bytes=vmem_limit),
        cost_estimate=cost,
    )(x3)

    return out3.reshape(B, C, H, W)


def _dog_reference(x: jnp.ndarray,
                   kernel_size: int = KS,
                   sigma1: float = 1.0,
                   sigma2: float = 2.0) -> jnp.ndarray:
    """Pure-JAX reference matching the PyTorch module (two depthwise convs)."""
    B, C, H, W = x.shape
    g1 = jnp.asarray(_gaussian_kernel_np(kernel_size, sigma1))
    g2 = jnp.asarray(_gaussian_kernel_np(kernel_size, sigma2))

    def dwconv(inp, g):
        wgt = jnp.broadcast_to(g, (C, 1, kernel_size, kernel_size))
        return jax.lax.conv_general_dilated(
            inp.astype(jnp.float32), wgt,
            window_strides=(1, 1), padding="SAME",
            dimension_numbers=("NCHW", "OIHW", "NCHW"),
            feature_group_count=C)

    return (dwconv(x, g1) - dwconv(x, g2)).astype(x.dtype)


if __name__ == "__main__":
    key = jax.random.PRNGKey(0)
    B, C, H, W = 2, 3, 16, 16   # DoGLayer default channels=3
    x = jax.random.normal(key, (B, C, H, W), dtype=jnp.float32)

    out = dog_layer(x)
    jax.block_until_ready(out)

    assert out.shape == (B, C, H, W)
    assert out.dtype == x.dtype

    ref = _dog_reference(x)
    np.testing.assert_allclose(np.asarray(out), np.asarray(ref),
                               atol=1e-5, rtol=1e-4)

    print("KERNEL_OK")
</pallas_src>

<mosaic_0001>
module attributes {stable_mosaic.version = 11 : i64} {
  func.func @kernel(%arg0: i32, %arg1: i32, %arg2: memref<6x16x16xf32, #tpu.memory_space<vmem>>, %arg3: memref<6x8x16xf32, #tpu.memory_space<vmem>>, %arg4: memref<20x120xf32, #tpu.memory_space<vmem>>) attributes {dimension_semantics = [#tpu.dimension_semantics<parallel>, #tpu.dimension_semantics<arbitrary>], iteration_bounds = array<i64: 1, 2>, scalar_prefetch = 0 : i64, scratch_operands = 1 : i64, tpu.core_type = #tpu.core_type<tc>, window_params = [{transform_indices = @transform_0, window_bounds = array<i64: 6, 16, 16>}, {transform_indices = @transform_1, window_bounds = array<i64: 6, 8, 16>}]} {
    %c0_i32 = arith.constant 0 : i32
    %0 = arith.cmpi eq, %arg1, %c0_i32 : i32
    %1 = arith.extui %0 : i1 to i32
    %c0_i32_0 = arith.constant 0 : i32
    %2 = arith.cmpi ne, %1, %c0_i32_0 : i32
    scf.if %2 {
      %cst_83 = arith.constant 0.000000e+00 : f32
      %178 = vector.broadcast %cst_83 : f32 to vector<20x120xf32>
      %c0_84 = arith.constant 0 : index
      %c0_85 = arith.constant 0 : index
      %179 = vector.load %arg4[%c0_84, %c0_85] : memref<20x120xf32, #tpu.memory_space<vmem>>, vector<20x120xf32>
      tpu.vector_store %arg4[%c0_84, %c0_85], %178 {strides = array<i32>} : memref<20x120xf32, #tpu.memory_space<vmem>>, vector<20x120xf32>,
      %c0_86 = arith.constant 0 : index
      %c0_87 = arith.constant 0 : index
      %c0_88 = arith.constant 0 : index
      %180 = vector.load %arg2[%c0_86, %c0_87, %c0_88] : memref<6x16x16xf32, #tpu.memory_space<vmem>>, vector<1x16x16xf32>
      %181 = vector.shape_cast %180 : vector<1x16x16xf32> to vector<16x16xf32>
      %c2_89 = arith.constant 2 : index
      %c2_90 = arith.constant 2 : index
      %182 = vector.load %arg4[%c2_89, %c2_90] : memref<20x120xf32, #tpu.memory_space<vmem>>, vector<16x16xf32>
      tpu.vector_store %arg4[%c2_89, %c2_90], %181 {strides = array<i32>} : memref<20x120xf32, #tpu.memory_space<vmem>>, vector<16x16xf32>,
      %c1_91 = arith.constant 1 : index
      %c0_92 = arith.constant 0 : index
      %c0_93 = arith.constant 0 : index
      %183 = vector.load %arg2[%c1_91, %c0_92, %c0_93] : memref<6x16x16xf32, #tpu.memory_space<vmem>>, vector<1x16x16xf32>
      %184 = vector.shape_cast %183 : vector<1x16x16xf32> to vector<16x16xf32>
      %c2_94 = arith.constant 2 : index
      %c22 = arith.constant 22 : index
      %185 = vector.load %arg4[%c2_94, %c22] : memref<20x120xf32, #tpu.memory_space<vmem>>, vector<16x16xf32>
      tpu.vector_store %arg4[%c2_94, %c22], %184 {strides = array<i32>} : memref<20x120xf32, #tpu.memory_space<vmem>>, vector<16x16xf32>,
      %c2_95 = arith.constant 2 : index
      %c0_96 = arith.constant 0 : index
      %c0_97 = arith.constant 0 : index
      %186 = vector.load %arg2[%c2_95, %c0_96, %c0_97] : memref<6x16x16xf32, #tpu.memory_space<vmem>>, vector<1x16x16xf32>
      %187 = vector.shape_cast %186 : vector<1x16x16xf32> to vector<16x16xf32>
      %c2_98 = arith.constant 2 : index
      %c42 = arith.constant 42 : index
      %188 = vector.load %arg4[%c2_98, %c42] : memref<20x120xf32, #tpu.memory_space<vmem>>, vector<16x16xf32>
      tpu.vector_store %arg4[%c2_98, %c42], %187 {strides = array<i32>} : memref<20x120xf32, #tpu.memory_space<vmem>>, vector<16x16xf32>,
      %c3_99 = arith.constant 3 : index
      %c0_100 = arith.constant 0 : index
      %c0_101 = arith.constant 0 : index
      %189 = vector.load %arg2[%c3_99, %c0_100, %c0_101] : memref<6x16x16xf32, #tpu.memory_space<vmem>>, vector<1x16x16xf32>
      %190 = vector.shape_cast %189 : vector<1x16x16xf32> to vector<16x16xf32>
      %c2_102 = arith.constant 2 : index
      %c62 = arith.constant 62 : index
      %191 = vector.load %arg4[%c2_102, %c62] : memref<20x120xf32, #tpu.memory_space<vmem>>, vector<16x16xf32>
      tpu.vector_store %arg4[%c2_102, %c62], %190 {strides = array<i32>} : memref<20x120xf32, #tpu.memory_space<vmem>>, vector<16x16xf32>,
      %c4_103 = arith.constant 4 : index
      %c0_104 = arith.constant 0 : index
      %c0_105 = arith.constant 0 : index
      %192 = vector.load %arg2[%c4_103, %c0_104, %c0_105] : memref<6x16x16xf32, #tpu.memory_space<vmem>>, vector<1x16x16xf32>
      %193 = vector.shape_cast %192 : vector<1x16x16xf32> to vector<16x16xf32>
      %c2_106 = arith.constant 2 : index
      %c82 = arith.constant 82 : index
      %194 = vector.load %arg4[%c2_106, %c82] : memref<20x120xf32, #tpu.memory_space<vmem>>, vector<16x16xf32>
      tpu.vector_store %arg4[%c2_106, %c82], %193 {strides = array<i32>} : memref<20x120xf32, #tpu.memory_space<vmem>>, vector<16x16xf32>,
      %c5_107 = arith.constant 5 : index
      %c0_108 = arith.constant 0 : index
      %c0_109 = arith.constant 0 : index
      %195 = vector.load %arg2[%c5_107, %c0_108, %c0_109] : memref<6x16x16xf32, #tpu.memory_space<vmem>>, vector<1x16x16xf32>
      %196 = vector.shape_cast %195 : vector<1x16x16xf32> to vector<16x16xf32>
      %c2_110 = arith.constant 2 : index
      %c102 = arith.constant 102 : index
      %197 = vector.load %arg4[%c2_110, %c102] : memref<20x120xf32, #tpu.memory_space<vmem>>, vector<16x16xf32>
      tpu.vector_store %arg4[%c2_110, %c102], %196 {strides = array<i32>} : memref<20x120xf32, #tpu.memory_space<vmem>>, vector<16x16xf32>,
    } else {
    }
    %c8_i32 = arith.constant 8 : i32
    %3 = arith.muli %arg1, %c8_i32 : i32
    %4 = tpu.assume_multiple %3, 8 : i32
    %c0_i32_1 = arith.constant 0 : i32
    %5 = arith.addi %4, %c0_i32_1 : i32
    %6 = arith.index_cast %5 : i32 to index
    %c0 = arith.constant 0 : index
    %7 = vector.load %arg4[%6, %c0] : memref<20x120xf32, #tpu.memory_space<vmem>>, vector<8x116xf32>
    %cst = arith.constant -0.0202778205 : f32
    %8 = vector.broadcast %cst : f32 to vector<8x116xf32>
    %9 = arith.mulf %8, %7 : vector<8x116xf32>
    %c0_i32_2 = arith.constant 0 : i32
    %10 = arith.addi %4, %c0_i32_2 : i32
    %11 = arith.index_cast %10 : i32 to index
    %c1 = arith.constant 1 : index
    %12 = vector.load %arg4[%11, %c1] : memref<20x120xf32, #tpu.memory_space<vmem>>, vector<8x116xf32>
    %cst_3 = arith.constant -0.0205177367 : f32
    %13 = vector.broadcast %cst_3 : f32 to vector<8x116xf32>
    %14 = arith.mulf %13, %12 : vector<8x116xf32>
    %15 = arith.addf %9, %14 : vector<8x116xf32>
    %c0_i32_4 = arith.constant 0 : i32
    %16 = arith.addi %4, %c0_i32_4 : i32
    %17 = arith.index_cast %16 : i32 to index
    %c2 = arith.constant 2 : index
    %18 = vector.load %arg4[%17, %c2] : memref<20x120xf32, #tpu.memory_space<vmem>>, vector<8x116xf32>
    %cst_5 = arith.constant -0.016389329 : f32
    %19 = vector.broadcast %cst_5 : f32 to vector<8x116xf32>
    %20 = arith.mulf %19, %18 : vector<8x116xf32>
    %21 = arith.addf %15, %20 : vector<8x116xf32>
    %c0_i32_6 = arith.constant 0 : i32
    %22 = arith.addi %4, %c0_i32_6 : i32
    %23 = arith.index_cast %22 : i32 to index
    %c3 = arith.constant 3 : index
    %24 = vector.load %arg4[%23, %c3] : memref<20x120xf32, #tpu.memory_space<vmem>>, vector<8x116xf32>
    %cst_7 = arith.constant -0.0205177367 : f32
    %25 = vector.broadcast %cst_7 : f32 to vector<8x116xf32>
    %26 = arith.mulf %25, %24 : vector<8x116xf32>
    %27 = arith.addf %21, %26 : vector<8x116xf32>
    %c0_i32_8 = arith.constant 0 : i32
    %28 = arith.addi %4, %c0_i32_8 : i32
    %29 = arith.index_cast %28 : i32 to index
    %c4 = arith.constant 4 : index
    %30 = vector.load %arg4[%29, %c4] : memref<20x120xf32, #tpu.memory_space<vmem>>, vector<8x116xf32>
    %cst_9 = arith.constant -0.0202778205 : f32
    %31 = vector.broadcast %cst_9 : f32 to vector<8x116xf32>
    %32 = arith.mulf %31, %30 : vector<8x116xf32>
    %33 = arith.addf %27, %32 : vector<8x116xf32>
    %c1_i32 = arith.constant 1 : i32
    %34 = arith.addi %4, %c1_i32 : i32
    %35 = arith.index_cast %34 : i32 to index
    %c0_10 = arith.constant 0 : index
    %36 = vector.load %arg4[%35, %c0_10] : memref<20x120xf32, #tpu.memory_space<vmem>>, vector<8x116xf32>
    %cst_11 = arith.constant -0.0205177367 : f32
    %37 = vector.broadcast %cst_11 : f32 to vector<8x116xf32>
    %38 = arith.mulf %37, %36 : vector<8x116xf32>
    %39 = arith.addf %33, %38 : vector<8x116xf32>
    %c1_i32_12 = arith.constant 1 : i32
    %40 = arith.addi %4, %c1_i32_12 : i32
    %41 = arith.index_cast %40 : i32 to index
    %c1_13 = arith.constant 1 : index
    %42 = vector.load %arg4[%41, %c1_13] : memref<20x120xf32, #tpu.memory_space<vmem>>, vector<8x116xf32>
    %cst_14 = arith.constant 0.0104207322 : f32
    %43 = vector.broadcast %cst_14 : f32 to vector<8x116xf32>
    %44 = arith.mulf %43, %42 : vector<8x116xf32>
    %45 = arith.addf %39, %44 : vector<8x116xf32>
    %c1_i32_15 = arith.constant 1 : i32
    %46 = arith.addi %4, %c1_i32_15 : i32
    %47 = arith.index_cast %46 : i32 to index
    %c2_16 = arith.constant 2 : index
    %48 = vector.load %arg4[%47, %c2_16] : memref<20x120xf32, #tpu.memory_space<vmem>>, vector<8x116xf32>
    %cst_17 = arith.constant 0.0425540581 : f32
    %49 = vector.broadcast %cst_17 : f32 to vector<8x116xf32>
    %50 = arith.mulf %49, %48 : vector<8x116xf32>
    %51 = arith.addf %45, %50 : vector<8x116xf32>
    %c1_i32_18 = arith.constant 1 : i32
    %52 = arith.addi %4, %c1_i32_18 : i32
    %53 = arith.index_cast %52 : i32 to index
    %c3_19 = arith.constant 3 : index
    %54 = vector.load %arg4[%53, %c3_19] : memref<20x120xf32, #tpu.memory_space<vmem>>, vector<8x116xf32>
    %cst_20 = arith.constant 0.0104207322 : f32
    %55 = vector.broadcast %cst_20 : f32 to vector<8x116xf32>
    %56 = arith.mulf %55, %54 : vector<8x116xf32>
    %57 = arith.addf %51, %56 : vector<8x116xf32>
    %c1_i32_21 = arith.constant 1 : i32
    %58 = arith.addi %4, %c1_i32_21 : i32
    %59 = arith.index_cast %58 : i32 to index
    %c4_22 = arith.constant 4 : index
    %60 = vector.load %arg4[%59, %c4_22] : memref<20x120xf32, #tpu.memory_space<vmem>>, vector<8x116xf32>
    %cst_23 = arith.constant -0.0205177367 : f32
    %61 = vector.broadcast %cst_23 : f32 to vector<8x116xf32>
    %62 = arith.mulf %61, %60 : vector<8x116xf32>
    %63 = arith.addf %57, %62 : vector<8x116xf32>
    %c2_i32 = arith.constant 2 : i32
    %64 = arith.addi %4, %c2_i32 : i32
    %65 = arith.index_cast %64 : i32 to index
    %c0_24 = arith.constant 0 : index
    %66 = vector.load %arg4[%65, %c0_24] : memref<20x120xf32, #tpu.memory_space<vmem>>, vector<8x116xf32>
    %cst_25 = arith.constant -0.016389329 : f32
    %67 = vector.broadcast %cst_25 : f32 to vector<8x116xf32>
    %68 = arith.mulf %67, %66 : vector<8x116xf32>
    %69 = arith.addf %63, %68 : vector<8x116xf32>
    %c2_i32_26 = arith.constant 2 : i32
    %70 = arith.addi %4, %c2_i32_26 : i32
    %71 = arith.index_cast %70 : i32 to index
    %c1_27 = arith.constant 1 : index
    %72 = vector.load %arg4[%71, %c1_27] : memref<20x120xf32, #tpu.memory_space<vmem>>, vector<8x116xf32>
    %cst_28 = arith.constant 0.0425540581 : f32
    %73 = vector.broadcast %cst_28 : f32 to vector<8x116xf32>
    %74 = arith.mulf %73, %72 : vector<8x116xf32>
    %75 = arith.addf %69, %74 : vector<8x116xf32>
    %c2_i32_29 = arith.constant 2 : i32
    %76 = arith.addi %4, %c2_i32_29 : i32
    %77 = arith.index_cast %76 : i32 to index
    %c2_30 = arith.constant 2 : index
    %78 = vector.load %arg4[%77, %c2_30] : memref<20x120xf32, #tpu.memory_space<vmem>>, vector<8x116xf32>
    %cst_31 = arith.constant 0.0989113524 : f32
    %79 = vector.broadcast %cst_31 : f32 to vector<8x116xf32>
    %80 = arith.mulf %79, %78 : vector<8x116xf32>
    %81 = arith.addf %75, %80 : vector<8x116xf32>
    %c2_i32_32 = arith.constant 2 : i32
    %82 = arith.addi %4, %c2_i32_32 : i32
    %83 = arith.index_cast %82 : i32 to index
    %c3_33 = arith.constant 3 : index
    %84 = vector.load %arg4[%83, %c3_33] : memref<20x120xf32, #tpu.memory_space<vmem>>, vector<8x116xf32>
    %cst_34 = arith.constant 0.0425540581 : f32
    %85 = vector.broadcast %cst_34 : f32 to vector<8x116xf32>
    %86 = arith.mulf %85, %84 : vector<8x116xf32>
    %87 = arith.addf %81, %86 : vector<8x116xf32>
    %c2_i32_35 = arith.constant 2 : i32
    %88 = arith.addi %4, %c2_i32_35 : i32
    %89 = arith.index_cast %88 : i32 to index
    %c4_36 = arith.constant 4 : index
    %90 = vector.load %arg4[%89, %c4_36] : memref<20x120xf32, #tpu.memory_space<vmem>>, vector<8x116xf32>
    %cst_37 = arith.constant -0.016389329 : f32
    %91 = vector.broadcast %cst_37 : f32 to vector<8x116xf32>
    %92 = arith.mulf %91, %90 : vector<8x116xf32>
    %93 = arith.addf %87, %92 : vector<8x116xf32>
    %c3_i32 = arith.constant 3 : i32
    %94 = arith.addi %4, %c3_i32 : i32
    %95 = arith.index_cast %94 : i32 to index
    %c0_38 = arith.constant 0 : index
    %96 = vector.load %arg4[%95, %c0_38] : memref<20x120xf32, #tpu.memory_space<vmem>>, vector<8x116xf32>
    %cst_39 = arith.constant -0.0205177367 : f32
    %97 = vector.broadcast %cst_39 : f32 to vector<8x116xf32>
    %98 = arith.mulf %97, %96 : vector<8x116xf32>
    %99 = arith.addf %93, %98 : vector<8x116xf32>
    %c3_i32_40 = arith.constant 3 : i32
    %100 = arith.addi %4, %c3_i32_40 : i32
    %101 = arith.index_cast %100 : i32 to index
    %c1_41 = arith.constant 1 : index
    %102 = vector.load %arg4[%101, %c1_41] : memref<20x120xf32, #tpu.memory_space<vmem>>, vector<8x116xf32>
    %cst_42 = arith.constant 0.0104207322 : f32
    %103 = vector.broadcast %cst_42 : f32 to vector<8x116xf32>
    %104 = arith.mulf %103, %102 : vector<8x116xf32>
    %105 = arith.addf %99, %104 : vector<8x116xf32>
    %c3_i32_43 = arith.constant 3 : i32
    %106 = arith.addi %4, %c3_i32_43 : i32
    %107 = arith.index_cast %106 : i32 to index
    %c2_44 = arith.constant 2 : index
    %108 = vector.load %arg4[%107, %c2_44] : memref<20x120xf32, #tpu.memory_space<vmem>>, vector<8x116xf32>
    %cst_45 = arith.constant 0.0425540581 : f32
    %109 = vector.broadcast %cst_45 : f32 to vector<8x116xf32>
    %110 = arith.mulf %109, %108 : vector<8x116xf32>
    %111 = arith.addf %105, %110 : vector<8x116xf32>
    %c3_i32_46 = arith.constant 3 : i32
    %112 = arith.addi %4, %c3_i32_46 : i32
    %113 = arith.index_cast %112 : i32 to index
    %c3_47 = arith.constant 3 : index
    %114 = vector.load %arg4[%113, %c3_47] : memref<20x120xf32, #tpu.memory_space<vmem>>, vector<8x116xf32>
    %cst_48 = arith.constant 0.0104207322 : f32
    %115 = vector.broadcast %cst_48 : f32 to vector<8x116xf32>
    %116 = arith.mulf %115, %114 : vector<8x116xf32>
    %117 = arith.addf %111, %116 : vector<8x116xf32>
    %c3_i32_49 = arith.constant 3 : i32
    %118 = arith.addi %4, %c3_i32_49 : i32
    %119 = arith.index_cast %118 : i32 to index
    %c4_50 = arith.constant 4 : index
    %120 = vector.load %arg4[%119, %c4_50] : memref<20x120xf32, #tpu.memory_space<vmem>>, vector<8x116xf32>
    %cst_51 = arith.constant -0.0205177367 : f32
    %121 = vector.broadcast %cst_51 : f32 to vector<8x116xf32>
    %122 = arith.mulf %121, %120 : vector<8x116xf32>
    %123 = arith.addf %117, %122 : vector<8x116xf32>
    %c4_i32 = arith.constant 4 : i32
    %124 = arith.addi %4, %c4_i32 : i32
    %125 = arith.index_cast %124 : i32 to index
    %c0_52 = arith.constant 0 : index
    %126 = vector.load %arg4[%125, %c0_52] : memref<20x120xf32, #tpu.memory_space<vmem>>, vector<8x116xf32>
    %cst_53 = arith.constant -0.0202778205 : f32
    %127 = vector.broadcast %cst_53 : f32 to vector<8x116xf32>
    %128 = arith.mulf %127, %126 : vector<8x116xf32>
    %129 = arith.addf %123, %128 : vector<8x116xf32>
    %c4_i32_54 = arith.constant 4 : i32
    %130 = arith.addi %4, %c4_i32_54 : i32
    %131 = arith.index_cast %130 : i32 to index
    %c1_55 = arith.constant 1 : index
    %132 = vector.load %arg4[%131, %c1_55] : memref<20x120xf32, #tpu.memory_space<vmem>>, vector<8x116xf32>
    %cst_56 = arith.constant -0.0205177367 : f32
    %133 = vector.broadcast %cst_56 : f32 to vector<8x116xf32>
    %134 = arith.mulf %133, %132 : vector<8x116xf32>
    %135 = arith.addf %129, %134 : vector<8x116xf32>
    %c4_i32_57 = arith.constant 4 : i32
    %136 = arith.addi %4, %c4_i32_57 : i32
    %137 = arith.index_cast %136 : i32 to index
    %c2_58 = arith.constant 2 : index
    %138 = vector.load %arg4[%137, %c2_58] : memref<20x120xf32, #tpu.memory_space<vmem>>, vector<8x116xf32>
    %cst_59 = arith.constant -0.016389329 : f32
    %139 = vector.broadcast %cst_59 : f32 to vector<8x116xf32>
    %140 = arith.mulf %139, %138 : vector<8x116xf32>
    %141 = arith.addf %135, %140 : vector<8x116xf32>
    %c4_i32_60 = arith.constant 4 : i32
    %142 = arith.addi %4, %c4_i32_60 : i32
    %143 = arith.index_cast %142 : i32 to index
    %c3_61 = arith.constant 3 : index
    %144 = vector.load %arg4[%143, %c3_61] : memref<20x120xf32, #tpu.memory_space<vmem>>, vector<8x116xf32>
    %cst_62 = arith.constant -0.0205177367 : f32
    %145 = vector.broadcast %cst_62 : f32 to vector<8x116xf32>
    %146 = arith.mulf %145, %144 : vector<8x116xf32>
    %147 = arith.addf %141, %146 : vector<8x116xf32>
    %c4_i32_63 = arith.constant 4 : i32
    %148 = arith.addi %4, %c4_i32_63 : i32
    %149 = arith.index_cast %148 : i32 to index
    %c4_64 = arith.constant 4 : index
    %150 = vector.load %arg4[%149, %c4_64] : memref<20x120xf32, #tpu.memory_space<vmem>>, vector<8x116xf32>
    %cst_65 = arith.constant -0.0202778205 : f32
    %151 = vector.broadcast %cst_65 : f32 to vector<8x116xf32>
    %152 = arith.mulf %151, %150 : vector<8x116xf32>
    %153 = arith.addf %147, %152 : vector<8x116xf32>
    %154 = vector.extract_strided_slice %153 {offsets = [0, 0], sizes = [8, 16], strides = [1, 1]} : vector<8x116xf32> to vector<8x16xf32>
    %c0_66 = arith.constant 0 : index
    %c0_67 = arith.constant 0 : index
    %c0_68 = arith.constant 0 : index
    %155 = vector.load %arg3[%c0_66, %c0_67, %c0_68] : memref<6x8x16xf32, #tpu.memory_space<vmem>>, vector<1x8x16xf32>
    %156 = vector.shape_cast %155 : vector<1x8x16xf32> to vector<8x16xf32>
    %157 = vector.shape_cast %154 : vector<8x16xf32> to vector<1x8x16xf32>
    tpu.vector_store %arg3[%c0_66, %c0_67, %c0_68], %157 {strides = array<i32>} : memref<6x8x16xf32, #tpu.memory_space<vmem>>, vector<1x8x16xf32>,
    %158 = vector.extract_strided_slice %153 {offsets = [0, 20], sizes = [8, 16], strides = [1, 1]} : vector<8x116xf32> to vector<8x16xf32>
    %c1_69 = arith.constant 1 : index
    %c0_70 = arith.constant 0 : index
    %c0_71 = arith.constant 0 : index
    %159 = vector.load %arg3[%c1_69, %c0_70, %c0_71] : memref<6x8x16xf32, #tpu.memory_space<vmem>>, vector<1x8x16xf32>
    %160 = vector.shape_cast %159 : vector<1x8x16xf32> to vector<8x16xf32>
    %161 = vector.shape_cast %158 : vector<8x16xf32> to vector<1x8x16xf32>
    tpu.vector_store %arg3[%c1_69, %c0_70, %c0_71], %161 {strides = array<i32>} : memref<6x8x16xf32, #tpu.memory_space<vmem>>, vector<1x8x16xf32>,
    %162 = vector.extract_strided_slice %153 {offsets = [0, 40], sizes = [8, 16], strides = [1, 1]} : vector<8x116xf32> to vector<8x16xf32>
    %c2_72 = arith.constant 2 : index
    %c0_73 = arith.constant 0 : index
    %c0_74 = arith.constant 0 : index
    %163 = vector.load %arg3[%c2_72, %c0_73, %c0_74] : memref<6x8x16xf32, #tpu.memory_space<vmem>>, vector<1x8x16xf32>
    %164 = vector.shape_cast %163 : vector<1x8x16xf32> to vector<8x16xf32>
    %165 = vector.shape_cast %162 : vector<8x16xf32> to vector<1x8x16xf32>
    tpu.vector_store %arg3[%c2_72, %c0_73, %c0_74], %165 {strides = array<i32>} : memref<6x8x16xf32, #tpu.memory_space<vmem>>, vector<1x8x16xf32>,
    %166 = vector.extract_strided_slice %153 {offsets = [0, 60], sizes = [8, 16], strides = [1, 1]} : vector<8x116xf32> to vector<8x16xf32>
    %c3_75 = arith.constant 3 : index
    %c0_76 = arith.constant 0 : index
    %c0_77 = arith.constant 0 : index
    %167 = vector.load %arg3[%c3_75, %c0_76, %c0_77] : memref<6x8x16xf32, #tpu.memory_space<vmem>>, vector<1x8x16xf32>
    %168 = vector.shape_cast %167 : vector<1x8x16xf32> to vector<8x16xf32>
    %169 = vector.shape_cast %166 : vector<8x16xf32> to vector<1x8x16xf32>
    tpu.vector_store %arg3[%c3_75, %c0_76, %c0_77], %169 {strides = array<i32>} : memref<6x8x16xf32, #tpu.memory_space<vmem>>, vector<1x8x16xf32>,
    %170 = vector.extract_strided_slice %153 {offsets = [0, 80], sizes = [8, 16], strides = [1, 1]} : vector<8x116xf32> to vector<8x16xf32>
    %c4_78 = arith.constant 4 : index
    %c0_79 = arith.constant 0 : index
    %c0_80 = arith.constant 0 : index
    %171 = vector.load %arg3[%c4_78, %c0_79, %c0_80] : memref<6x8x16xf32, #tpu.memory_space<vmem>>, vector<1x8x16xf32>
    %172 = vector.shape_cast %171 : vector<1x8x16xf32> to vector<8x16xf32>
    %173 = vector.shape_cast %170 : vector<8x16xf32> to vector<1x8x16xf32>
    tpu.vector_store %arg3[%c4_78, %c0_79, %c0_80], %173 {strides = array<i32>} : memref<6x8x16xf32, #tpu.memory_space<vmem>>, vector<1x8x16xf32>,
    %174 = vector.extract_strided_slice %153 {offsets = [0, 100], sizes = [8, 16], strides = [1, 1]} : vector<8x116xf32> to vector<8x16xf32>
    %c5 = arith.constant 5 : index
    %c0_81 = arith.constant 0 : index
    %c0_82 = arith.constant 0 : index
    %175 = vector.load %arg3[%c5, %c0_81, %c0_82] : memref<6x8x16xf32, #tpu.memory_space<vmem>>, vector<1x8x16xf32>
    %176 = vector.shape_cast %175 : vector<1x8x16xf32> to vector<8x16xf32>
    %177 = vector.shape_cast %174 : vector<8x16xf32> to vector<1x8x16xf32>
    tpu.vector_store %arg3[%c5, %c0_81, %c0_82], %177 {strides = array<i32>} : memref<6x8x16xf32, #tpu.memory_space<vmem>>, vector<1x8x16xf32>,
    return
  }
  func.func @transform_0(%arg0: i32, %arg1: i32) -> (i32, i32, i32) {
    %c0_i32 = arith.constant 0 : i32
    %c0_i32_0 = arith.constant 0 : i32
    %c0_i32_1 = arith.constant 0 : i32
    return %arg0, %c0_i32, %c0_i32_0 : i32, i32, i32
  }
  func.func @transform_1(%arg0: i32, %arg1: i32) -> (i32, i32, i32) {
    %c0_i32 = arith.constant 0 : i32
    %c0_i32_0 = arith.constant 0 : i32
    return %arg0, %arg1, %c0_i32 : i32, i32, i32
  }
}

</mosaic_0001>

<llo_original>
// kernel: tpu_custom_call.1
$region0: #{tpu_custom_call.1}
  #allocation0 [shape = 'u32[]', space=smem, size = 0x4, offset = 0x4, fixed_abs, tag = 'smem constant byte address 0x4 - core index']
  #allocation1 [shape = 'u32[144,128]{1,0:T(1,128)}', space=vmem, size = 0x12000, scoped, tag = 'internal scratch']
  #allocation2 [shape = 'f32[20,120]{1,0:T(8,128)}', space=vmem, size = 0x3000, scoped, tag = 'scratch operand']
  %s0 = inlined_call_operand.hbm [shape: f32[6,16,16], index: 0, kind: input, shape index: {}]
  %s1 = inlined_call_operand.hbm [shape: f32[6,16,16], index: 1, kind: output, shape index: {}]
  %s2 = sld [smem:[#allocation0]]
  $region45: #{tpu_custom_call.1} parent=0
    _
  %s4 = ssub.s32 1, %s2
  %s5 = scalar_select 0, %s4, %s2
  $region1: #{tpu_custom_call.1} parent=0
    #allocation3 [shape = 'u8[49152]{0}', space=vmem, size = 0xc000, scoped, tag = 'input window, operand 0, single buffered']
    #allocation4 [shape = 's32[2]{0}', space=sflag, size = 0x8, scoped, tag = 'scoped memory for tpu_custom_call.1']
    #allocation5 [shape = 's32[2]{0}', space=sflag, size = 0x8, scoped, tag = 'scoped memory for tpu_custom_call.1']
    #allocation6 [shape = 'u8[49152]{0}', space=vmem, size = 0xc000, scoped, tag = 'output window, operand 0']
    %6 = vsyncpa [#allocation4], 0
    %7 = vsyncpa [#allocation5], 0
    %s8 = scalar_lea.sflag [#allocation5], 1
    %9 = vsyncpa %s8, 0
    loop: start=0, step=1, limit=4
    $region2: #{tpu_custom_call.1} parent=1 // loop_pre_header
      _
    $region3: #{tpu_custom_call.1} parent=1 // loop_header
      %s11 = sphi 0, %s15
      %p12 = scmp.ge.s32.totalorder %s11, 4
      %s18 = sphi 0, %s30
      %s19 = sphi 0, %s26
      %s20 = sphi 0, %s18
      %s21 = sphi 0, %s19
      %s22 = sphi 0, %s20
      %s23 = sphi 0, %s21
      %s33 = sphi 0, %s35
      %s36 = sphi 0, %s33
      %s37 = sphi 0, %s36
      %s53 = sphi 0, %s37
      %s61 = sphi 0, %s63
      %s64 = sphi 0, %s61
      %s65 = sphi 0, %s64
      %s81 = sphi 0, %s65
    $region4: #{tpu_custom_call.1} parent=1 // loop_header_branch
      %14 = sbr.rel (%p12) target = $region8
    $region5: #{tpu_custom_call.1} parent=1 // loop_body
      %s16 = ssub.s32 %s11, 1
      %s17 = ssub.s32 %s11, 2
      %s24 = sadd.s32 1, %s19
      %p25 = scmp.ge.s32.totalorder %s24, 2
      %s26 = scalar_select %p25, 0, %s24
      %s27 = sadd.s32 1, %s18
      %s28 = scalar_select %p25, %s27, %s18
      %p29 = scmp.ge.s32.totalorder %s28, 1
      %s30 = scalar_select %p29, 0, %s28
      %s31 = ssub.s32 %s18, %s30
      %p32 = scmp.eq.s32.totalorder %s31, 0
      %s34 = sadd.s32 %s33, 1
      %s35 = scalar_select %p32, %s33, %s34
      %p38 = pneg %p32
      %p39 = scmp.eq.s32.totalorder %s11, 1
      %p40 = por %p38, %p39
      %p41 = scmp.ne.s32.totalorder %s33, %s36
      %p42 = scmp.eq.s32.totalorder %s11, 0
      %p43 = por %p41, %p42
      %p44 = scmp.ne.s32.totalorder %s33, %s36
      %p45 = scmp.eq.s32.totalorder %s16, 1
      %p46 = por %p44, %p45
      %p47 = scmp.ne.s32.totalorder %s36, %s37
      %p48 = scmp.eq.s32.totalorder %s16, 0
      %p49 = por %p47, %p48
      %p50 = scmp.ne.s32.totalorder %s36, %s37
      %p51 = scmp.eq.s32.totalorder %s17, 1
      %p52 = por %p50, %p51
      %p54 = scmp.ne.s32.totalorder %s37, %s53
      %p55 = scmp.eq.s32.totalorder %s17, 0
      %p56 = por %p54, %p55
      %s57 = ssub.s32 %s18, %s30
      %s58 = ssub.s32 %s19, %s26
      %s59 = sor.u32 %s57, %s58
      %p60 = scmp.eq.s32.totalorder %s59, 0
      %s62 = sadd.s32 %s61, 1
      %s63 = scalar_select %p60, %s61, %s62
      %p66 = pneg %p60
      %p67 = scmp.eq.s32.totalorder %s11, 1
      %p68 = por %p66, %p67
      %p69 = scmp.ne.s32.totalorder %s61, %s64
      %p70 = scmp.eq.s32.totalorder %s11, 0
      %p71 = por %p69, %p70
      %p72 = scmp.ne.s32.totalorder %s61, %s64
      %p73 = scmp.eq.s32.totalorder %s16, 1
      %p74 = por %p72, %p73
      %p75 = scmp.ne.s32.totalorder %s64, %s65
      %p76 = scmp.eq.s32.totalorder %s16, 0
      %p77 = por %p75, %p76
      %p78 = scmp.ne.s32.totalorder %s64, %s65
      %p79 = scmp.eq.s32.totalorder %s17, 1
      %p80 = por %p78, %p79
      %p82 = scmp.ne.s32.totalorder %s65, %s81
      %p83 = scmp.eq.s32.totalorder %s17, 0
      %p84 = por %p82, %p83
      %p85 = scmp.le.s32.totalorder 1, %s11
      %p86 = scmp.lt.s32.totalorder %s11, 3
      %p87 = pnand %p85, %p86
      %p88 = pneg %p87
      // Predicated region
      $region9: #{tpu_custom_call.1} parent=5 // pred_check
        _
      $region10: #{tpu_custom_call.1} parent=5 // pred_check_branch
        %90 = sbr.rel (%p87) target = $region12
      $region11: #{tpu_custom_call.1} parent=5 // pred_region
        %s91 = ssub.s32 %s11, 1
        // Predicated region
        $region13: #{tpu_custom_call.1} parent=11 // pred_check
          %p92 = pneg %p49
        $region14: #{tpu_custom_call.1} parent=11 // pred_check_branch
          %94 = sbr.rel (%p92) target = $region16
        $region15: #{tpu_custom_call.1} parent=11 // pred_region
          %s95 = smul.u32 6, %s20
          %s97 = ssub.s32 1536, 1536
          %98 = vsyncadd [#allocation4], %s97
          %s99 = smul.addr %s95, 2
          %s100 = smul.addr %s99, 128
          %s101 = scalar_lea.hbm %s0, %s100
          %s102 = sshll.u32 [#allocation3], 4
          %s103 = int_to_ptr.vmem [resolvable:$true] %s102
          %108 = dma.hbm_to_vmem [thread:$0]  %s101, 1536, %s103, [#allocation4], 128, 128, 8
        $region16: #{tpu_custom_call.1} parent=11 // pred_fallthru
          _
      $region12: #{tpu_custom_call.1} parent=5 // pred_fallthru
        _
      %p109 = scmp.lt.s32.totalorder %s11, 2
      // Predicated region
      $region17: #{tpu_custom_call.1} parent=5 // pred_check
        %p110 = pneg %p109
      $region18: #{tpu_custom_call.1} parent=5 // pred_check_branch
        %112 = sbr.rel (%p110) target = $region20
      $region19: #{tpu_custom_call.1} parent=5 // pred_region
        _
      $region20: #{tpu_custom_call.1} parent=5 // pred_fallthru
        _
      %p113 = scmp.le.s32.totalorder 1, %s11
      %p114 = scmp.lt.s32.totalorder %s11, 3
      %p115 = pnand %p113, %p114
      %p116 = pneg %p115
      // Predicated region
      $region21: #{tpu_custom_call.1} parent=5 // pred_check
        _
      $region22: #{tpu_custom_call.1} parent=5 // pred_check_branch
        %118 = sbr.rel (%p115) target = $region24
      $region23: #{tpu_custom_call.1} parent=5 // pred_region
        %s119 = ssub.s32 %s11, 1
        // Predicated region
        $region25: #{tpu_custom_call.1} parent=23 // pred_check
          %p120 = pneg %p49
        $region26: #{tpu_custom_call.1} parent=23 // pred_check_branch
          %122 = sbr.rel (%p120) target = $region28
        $region27: #{tpu_custom_call.1} parent=23 // pred_region
          %123 = dma.done [#allocation4], 1536
        $region28: #{tpu_custom_call.1} parent=23 // pred_fallthru
          _
        %p124 = pneg %p49
        %p125 = pneg %p46
        %p126 = pneg %p77
        %p127 = pneg %p74
        %s128 = sand.u32 %s64, 1
        %s129 = scalar_lea.sflag [#allocation5], %s128
        %s130 = sand.u32 %s64, 1
        %s131 = smul.addr %s130, 48
        %s132 = scalar_lea.vmem [#allocation6], %s131
        %s133 = smul.u32 6, %s20
        %s134 = smul.u32 6, %s20
        %p135 = scmp.eq.s32.totalorder %s21, 0
        // Predicated region
        $region29: #{tpu_custom_call.1} parent=23 // pred_check
          %p136 = pneg %p135
        $region30: #{tpu_custom_call.1} parent=23 // pred_check_branch
          %138 = sbr.rel (%p136) target = $region32
        $region31: #{tpu_custom_call.1} parent=23 // pred_region
          %vm139 = vcmask 982016
          %140 = vst.msk [vmem:[#allocation2] sm:$0xff] %vm139, 0.0
          %141 = vst.msk [vmem:[#allocation2 + $0x8] sm:$0xff] %vm139, 0.0
          %vm142 = vcmask 977920
          %143 = vst.msk [vmem:[#allocation2 + $0x10] sm:$0xf] %vm142, 0.0
          %v144 = vld [vmem:[#allocation3] sm:$0xff]
          %v145 = vld [vmem:[#allocation3 + $0x8] sm:$0xff]
          %148 = vrot.lane.b32.xlu0 %v144, 2
          %v149 = vpop.permute.xlu0 %148
          %150 = vrot.lane.b32.xlu0 %v145, 2
          %v151 = vpop.permute.xlu0 %150
          %vm154 = vcmask 146448
          %155 = vst.msk [vmem:[#allocation2 + $0x2] sm:$0xff] %vm154, %v149
          %156 = vst.msk [vmem:[#allocation2 + $0xa] sm:$0xff] %vm154, %v151
          %s157 = scalar_lea.vmem [#allocation3], 16
          %v158 = vld [vmem:[%s157] sm:$0xff]
          %v159 = vld [vmem:[%s157 + $0x8] sm:$0xff]
          %162 = vrot.lane.b32.xlu0 %v158, 22
          %v163 = vpop.permute.xlu0 %162
          %164 = vrot.lane.b32.xlu0 %v159, 22
          %v165 = vpop.permute.xlu0 %164
          %vm168 = vcmask 310448
          %169 = vst.msk [vmem:[#allocation2 + $0x2] sm:$0xff] %vm168, %v163
          %170 = vst.msk [vmem:[#allocation2 + $0xa] sm:$0xff] %vm168, %v165
          %s171 = scalar_lea.vmem [#allocation3], 32
          %v172 = vld [vmem:[%s171] sm:$0xff]
          %v173 = vld [vmem:[%s171 + $0x8] sm:$0xff]
          %176 = vrot.lane.b32.xlu0 %v172, 42
          %v177 = vpop.permute.xlu0 %176
          %178 = vrot.lane.b32.xlu0 %v173, 42
          %v179 = vpop.permute.xlu0 %178
          %vm182 = vcmask 474448
          %183 = vst.msk [vmem:[#allocation2 + $0x2] sm:$0xff] %vm182, %v177
          %184 = vst.msk [vmem:[#allocation2 + $0xa] sm:$0xff] %vm182, %v179
          %s185 = scalar_lea.vmem [#allocation3], 48
          %v186 = vld [vmem:[%s185] sm:$0xff]
          %v187 = vld [vmem:[%s185 + $0x8] sm:$0xff]
          %190 = vrot.lane.b32.xlu0 %v186, 62
          %v191 = vpop.permute.xlu0 %190
          %192 = vrot.lane.b32.xlu0 %v187, 62
          %v193 = vpop.permute.xlu0 %192
          %vm196 = vcmask 638448
          %197 = vst.msk [vmem:[#allocation2 + $0x2] sm:$0xff] %vm196, %v191
          %198 = vst.msk [vmem:[#allocation2 + $0xa] sm:$0xff] %vm196, %v193
          %s199 = scalar_lea.vmem [#allocation3], 64
          %v200 = vld [vmem:[%s199] sm:$0xff]
          %v201 = vld [vmem:[%s199 + $0x8] sm:$0xff]
          %204 = vrot.lane.b32.xlu0 %v200, 82
          %v205 = vpop.permute.xlu0 %204
          %206 = vrot.lane.b32.xlu0 %v201, 82
          %v207 = vpop.permute.xlu0 %206
          %vm210 = vcmask 802448
          %211 = vst.msk [vmem:[#allocation2 + $0x2] sm:$0xff] %vm210, %v205
          %212 = vst.msk [vmem:[#allocation2 + $0xa] sm:$0xff] %vm210, %v207
          %s213 = scalar_lea.vmem [#allocation3], 80
          %v214 = vld [vmem:[%s213] sm:$0xff]
          %v215 = vld [vmem:[%s213 + $0x8] sm:$0xff]
          %218 = vrot.lane.b32.xlu0 %v214, 102
          %v219 = vpop.permute.xlu0 %218
          %220 = vrot.lane.b32.xlu0 %v215, 102
          %v221 = vpop.permute.xlu0 %220
          %vm224 = vcmask 966448
          %225 = vst.msk [vmem:[#allocation2 + $0x2] sm:$0xff] %vm224, %v219
          %226 = vst.msk [vmem:[#allocation2 + $0xa] sm:$0xff] %vm224, %v221
        $region32: #{tpu_custom_call.1} parent=23 // pred_fallthru
          _
        %s227 = smul.u32 %s21, 8
        %s228 = scalar_lea.vmem [#allocation2], %s227
        %v229 = vld [vmem:[%s228] sm:$0xff]
        %v230 = vmul.f32 %v229, -0.02027782
        %v231 = vmul.f32 %v229, -0.020517737
        %233 = vrot.lane.b32.xlu0 %v231, 127
        %v234 = vpop.permute.xlu0 %233
        %v236 = vadd.f32 %v230, %v234
        %v237 = vmul.f32 %v229, -0.016389329
        %239 = vrot.lane.b32.xlu0 %v237, 126
        %v240 = vpop.permute.xlu0 %239
        %v242 = vadd.f32 %v236, %v240
        %243 = vrot.lane.b32.xlu0 %v231, 125
        %v244 = vpop.permute.xlu0 %243
        %v246 = vadd.f32 %v242, %v244
        %248 = vrot.lane.b32.xlu0 %v230, 124
        %v249 = vpop.permute.xlu0 %248
        %v251 = vadd.f32 %v246, %v249
        %s252 = sadd.s32 %s227, 1
        %s253 = scalar_lea.vmem [#allocation2], %s252
        %v254 = vld [vmem:[%s253] sm:$0xff]
        %v255 = vmul.f32 %v254, -0.020517737
        %v256 = vadd.f32 %v251, %v255
        %v257 = vmul.f32 %v254, 0.010420732
        %259 = vrot.lane.b32.xlu0 %v257, 127
        %v260 = vpop.permute.xlu0 %259
        %v262 = vadd.f32 %v256, %v260
        %v263 = vmul.f32 %v254, 0.042554058
        %265 = vrot.lane.b32.xlu0 %v263, 126
        %v266 = vpop.permute.xlu0 %265
        %v268 = vadd.f32 %v262, %v266
        %269 = vrot.lane.b32.xlu0 %v257, 125
        %v270 = vpop.permute.xlu0 %269
        %v272 = vadd.f32 %v268, %v270
        %274 = vrot.lane.b32.xlu0 %v255, 124
        %v275 = vpop.permute.xlu0 %274
        %v277 = vadd.f32 %v272, %v275
        %s278 = sadd.s32 %s227, 2
        %s279 = scalar_lea.vmem [#allocation2], %s278
        %v280 = vld [vmem:[%s279] sm:$0xff]
        %v281 = vmul.f32 %v280, -0.016389329
        %v282 = vadd.f32 %v277, %v281
        %v283 = vmul.f32 %v280, 0.042554058
        %285 = vrot.lane.b32.xlu0 %v283, 127
        %v286 = vpop.permute.xlu0 %285
        %v288 = vadd.f32 %v282, %v286
        %v289 = vmul.f32 %v280, 0.09891135
        %291 = vrot.lane.b32.xlu0 %v289, 126
        %v292 = vpop.permute.xlu0 %291
        %v294 = vadd.f32 %v288, %v292
        %295 = vrot.lane.b32.xlu0 %v283, 125
        %v296 = vpop.permute.xlu0 %295
        %v298 = vadd.f32 %v294, %v296
        %300 = vrot.lane.b32.xlu0 %v281, 124
        %v301 = vpop.permute.xlu0 %300
        %v303 = vadd.f32 %v298, %v301
        %s304 = sadd.s32 %s227, 3
        %s305 = scalar_lea.vmem [#allocation2], %s304
        %v306 = vld [vmem:[%s305] sm:$0xff]
        %v307 = vmul.f32 %v306, -0.020517737
        %v308 = vadd.f32 %v303, %v307
        %v309 = vmul.f32 %v306, 0.010420732
        %311 = vrot.lane.b32.xlu0 %v309, 127
        %v312 = vpop.permute.xlu0 %311
        %v314 = vadd.f32 %v308, %v312
        %v315 = vmul.f32 %v306, 0.042554058
        %317 = vrot.lane.b32.xlu0 %v315, 126
        %v318 = vpop.permute.xlu0 %317
        %v320 = vadd.f32 %v314, %v318
        %321 = vrot.lane.b32.xlu0 %v309, 125
        %v322 = vpop.permute.xlu0 %321
        %v324 = vadd.f32 %v320, %v322
        %326 = vrot.lane.b32.xlu0 %v307, 124
        %v327 = vpop.permute.xlu0 %326
        %v329 = vadd.f32 %v324, %v327
        %s330 = sadd.s32 %s227, 4
        %s331 = scalar_lea.vmem [#allocation2], %s330
        %v332 = vld [vmem:[%s331] sm:$0xff]
        %v333 = vmul.f32 %v332, -0.02027782
        %v334 = vadd.f32 %v329, %v333
        %v335 = vmul.f32 %v332, -0.020517737
        %337 = vrot.lane.b32.xlu0 %v335, 127
        %v338 = vpop.permute.xlu0 %337
        %v340 = vadd.f32 %v334, %v338
        %v341 = vmul.f32 %v332, -0.016389329
        %343 = vrot.lane.b32.xlu0 %v341, 126
        %v344 = vpop.permute.xlu0 %343
        %v346 = vadd.f32 %v340, %v344
        %347 = vrot.lane.b32.xlu0 %v335, 125
        %v348 = vpop.permute.xlu0 %347
        %v350 = vadd.f32 %v346, %v348
        %352 = vrot.lane.b32.xlu0 %v333, 124
        %v353 = vpop.permute.xlu0 %352
        %v355 = vadd.f32 %v350, %v353
        %vm356 = vcmask 130048
        %357 = vst.msk [vmem:[%s132] sm:$0xff] %vm356, %v355
        %359 = vrot.lane.b32.xlu0 %v355, 108
        %v360 = vpop.permute.xlu0 %359
        %s362 = scalar_lea.vmem %s132, 8 [#allocation6]
        %363 = vst.msk [vmem:[%s362] sm:$0xff] %vm356, %v360
        %364 = vrot.lane.b32.xlu0 %v355, 88
        %v365 = vpop.permute.xlu0 %364
        %s367 = scalar_lea.vmem %s132, 16 [#allocation6]
        %368 = vst.msk [vmem:[%s367] sm:$0xff] %vm356, %v365
        %369 = vrot.lane.b32.xlu0 %v355, 68
        %v370 = vpop.permute.xlu0 %369
        %s372 = scalar_lea.vmem %s132, 24 [#allocation6]
        %373 = vst.msk [vmem:[%s372] sm:$0xff] %vm356, %v370
        %374 = vrot.lane.b32.xlu0 %v355, 48
        %v375 = vpop.permute.xlu0 %374
        %s377 = scalar_lea.vmem %s132, 32 [#allocation6]
        %378 = vst.msk [vmem:[%s377] sm:$0xff] %vm356, %v375
        %379 = vrot.lane.b32.xlu0 %v355, 28
        %v380 = vpop.permute.xlu0 %379
        %s382 = scalar_lea.vmem %s132, 40 [#allocation6]
        %383 = vst.msk [vmem:[%s382] sm:$0xff] %vm356, %v380
        %s384 = sand.u32 %s64, 1
        %s385 = scalar_lea.sflag [#allocation5], %s384
        %s386 = sand.u32 %s64, 1
        %s387 = smul.addr %s386, 48
        %s388 = scalar_lea.vmem [#allocation6], %s387
        // Predicated region
        $region33: #{tpu_custom_call.1} parent=23 // pred_check
          %p389 = pneg %p74
        $region34: #{tpu_custom_call.1} parent=23 // pred_check_branch
          %391 = sbr.rel (%p389) target = $region36
        $region35: #{tpu_custom_call.1} parent=23 // pred_region
          %s392 = smul.u32 6, %s20
          %s394 = ssub.s32 768, 768
          %395 = vsyncadd %s385, %s394
          %s396 = smul.addr %s392, 2
          %s397 = sadd.s32 %s21, %s396
          %s398 = smul.addr %s397, 128
          %s399 = scalar_lea.hbm %s1, %s398
          %s400 = sshll.u32 %s388, 4
          %s401 = int_to_ptr.vmem [resolvable:$true] %s400
          %406 = dma.vmem_to_hbm [thread:$0]  %s401, 768, %s399, %s385, 128, 256, 8
        $region36: #{tpu_custom_call.1} parent=23 // pred_fallthru
          _
      $region24: #{tpu_custom_call.1} parent=5 // pred_fallthru
        _
      %p407 = scmp.le.s32.totalorder 2, %s11
      // Predicated region
      $region37: #{tpu_custom_call.1} parent=5 // pred_check
        %p408 = pneg %p407
      $region38: #{tpu_custom_call.1} parent=5 // pred_check_branch
        %410 = sbr.rel (%p408) target = $region40
      $region39: #{tpu_custom_call.1} parent=5 // pred_region
        %s411 = ssub.s32 %s11, 2
        // Predicated region
        $region41: #{tpu_custom_call.1} parent=39 // pred_check
          %p412 = pneg %p80
        $region42: #{tpu_custom_call.1} parent=39 // pred_check_branch
          %414 = sbr.rel (%p412) target = $region44
        $region43: #{tpu_custom_call.1} parent=39 // pred_region
          %s415 = sand.u32 %s65, 1
          %s416 = scalar_lea.sflag [#allocation5], %s415
          %s417 = sand.u32 %s65, 1
          %s418 = smul.addr %s417, 48
          %s419 = scalar_lea.vmem [#allocation6], %s418
          %420 = dma.done %s416, 768
        $region44: #{tpu_custom_call.1} parent=39 // pred_fallthru
          _
      $region40: #{tpu_custom_call.1} parent=5 // pred_fallthru
        _
    $region6: #{tpu_custom_call.1} parent=1 // loop_footer
      %s15 = sadd.s32 1, %s11
    $region7: #{tpu_custom_call.1} parent=1 // loop_footer_branch
      %10 = sbr.rel target = $region3
    $region8: #{tpu_custom_call.1} parent=1 // loop_exit
      _
    %421 = vsyncpa [#allocation4], 1
    %s422 = scalar_lea.sflag [#allocation4], 1
    %423 = vsyncpa %s422, 1
    %424 = vsyncpa [#allocation5], 1
    %s425 = scalar_lea.sflag [#allocation5], 1
    %426 = vsyncpa %s425, 1

</llo_original>
